<compile_context>
chip_gen: v6e
topology: v6e:2x2x1
jax: 0.10.0
libtpu: 0.0.40
codegen_flags: <defaults>
</compile_context>

<pallas_src>
import functools

import jax
import jax.numpy as jnp
from jax.experimental import pallas as pl
from jax.experimental.pallas import tpu as pltpu


def _conv1d_block_kernel(x_ref, w_ref, b_ref, g_ref, beta_ref, r_ref, o_ref,
                         *, K, pad, p, eps):
    # x_ref:    [B, C_in, T]        unpadded input (time on lanes)
    # w_ref:    [C_out, K*C_in]     im2col-reshaped conv weight (tap-major rows)
    # b_ref:    [C_out, 1]          conv bias
    # g_ref:    [C_out, 1]          batchnorm gamma
    # beta_ref: [C_out, 1]          batchnorm beta
    # r_ref:    [B, C_out, T_out]   int32 uniforms in [0, 2^24) for dropout
    # o_ref:    [B, C_out, T_out]
    B, C_in, T = x_ref.shape
    C_out, T_out = o_ref.shape[1], o_ref.shape[2]

    zcol = jnp.zeros((C_in, pad), jnp.float32) if pad > 0 else None

    # ---- pass 1: conv (single im2col matmul per batch) + bias + ReLU ----
    # Write conv+ReLU into o_ref (bounds live state to one batch tile) and
    # accumulate one-pass BatchNorm statistics.
    sum_acc = jnp.zeros((C_out, 1), jnp.float32)
    sq_acc = jnp.zeros((C_out, 1), jnp.float32)
    for b in range(B):
        xb = x_ref[b]
        xp = xb if pad == 0 else jnp.concatenate([zcol, xb, zcol], axis=1)
        # (K*C_in, T_out): K shifted views stacked along the sublane axis.
        stack = jnp.concatenate([xp[:, k:k + T_out] for k in range(K)], axis=0)
        y = jnp.dot(w_ref[...], stack, preferred_element_type=jnp.float32)
        y = jnp.maximum(y + b_ref[...], 0.0)
        o_ref[b] = y
        sum_acc = sum_acc + jnp.sum(y, axis=1, keepdims=True)
        sq_acc = sq_acc + jnp.sum(y * y, axis=1, keepdims=True)

    # ---- BatchNorm1d training-mode batch stats (biased variance over (B, T)) ----
    inv_n = jnp.float32(1.0 / (B * T_out))
    mean = sum_acc * inv_n
    var = sq_acc * inv_n - mean * mean
    inv = jax.lax.rsqrt(var + jnp.float32(eps))

    # ---- fused affine: fold gamma, beta, mean, inv and 1/(1-p) into scale/shift ----
    keep_scale = jnp.float32(1.0 / (1.0 - p)) if p < 1.0 else jnp.float32(0.0)
    scale = g_ref[...] * inv * keep_scale                       # (C_out, 1)
    shift = (beta_ref[...] - mean * g_ref[...] * inv) * keep_scale

    # Integer dropout threshold at 24-bit resolution: keep iff r >= round(p * 2^24).
    thr = min(max(int(round(p * (1 << 24))), 0), 1 << 24)

    # ---- pass 2: normalize + dropout, in place on o_ref ----
    for b in range(B):
        z = o_ref[b] * scale + shift
        if p > 0.0:
            z = jnp.where(r_ref[b] >= thr, z, 0.0)
        o_ref[b] = z


def conv1d_block(x, weight, bias, gamma, beta, *, dropout_p, key, eps=1e-5):
    """Forward of Conv1DBlock.

    x: [B, C_in, T]; weight: [C_out, C_in, K]; returns [B, C_out, T_out]
    (T_out == T for odd K, matching nn.Conv1d(padding=K//2)).
    """
    B, C_in, T = x.shape
    C_out, _, K = weight.shape
    pad = K // 2
    T_out = T + 2 * pad - (K - 1)

    # im2col weight: row block k holds tap k -> (C_out, K*C_in), tap-major.
    w2 = jnp.transpose(weight, (0, 2, 1)).reshape(C_out, K * C_in)
    bias2 = bias.reshape(C_out, 1).astype(jnp.float32)
    gamma2 = gamma.reshape(C_out, 1).astype(jnp.float32)
    beta2 = beta.reshape(C_out, 1).astype(jnp.float32)

    # Dropout randomness generated with jax.random (portable; the TPU hardware
    # PRNG has no interpret/CPU lowering).  24-bit uniforms, integer-compared
    # against the threshold inside the kernel.
    rnd = jax.random.randint(key, (B, C_out, T_out), 0, 1 << 24, dtype=jnp.int32)

    kernel = functools.partial(_conv1d_block_kernel, K=K, pad=pad,
                               p=float(dropout_p), eps=float(eps))
    vmem = pl.BlockSpec(memory_space=pltpu.MemorySpace.VMEM)

    # Single fully-VMEM-resident program (small shapes; T should be a multiple
    # of 128 for lane-dense stores).
    # TODO(synk): for production sizes, grid over B/T tiles with a partial-stats
    # pass + finalize (uses v7x's 2nd TensorCore, respects its 64 MiB VMEM) and
    # cast matmul operands to bf16; BatchNorm running_mean/var updates are not
    # produced (training-mode side effect of the nn.Module).
    return pl.pallas_call(
        kernel,
        out_shape=jax.ShapeDtypeStruct((B, C_out, T_out), jnp.float32),
        in_specs=[vmem] * 6,
        out_specs=vmem,
    )(x.astype(jnp.float32), w2.astype(jnp.float32), bias2, gamma2, beta2, rnd)


if __name__ == "__main__":
    # Small shapes consistent with the module's [B, C, T] forward.
    B, C_in, C_out, T, K = 2, 8, 16, 128, 5
    dropout = 0.1
    eps = 1e-5

    key = jax.random.PRNGKey(0)
    k1, k2, k3, k4 = jax.random.split(key, 4)

    # Deterministic parameter init (PyTorch-default-like uniform bounds for conv).
    fan_in = C_in * K
    bound = 1.0 / (fan_in ** 0.5)
    weight = jax.random.uniform(k1, (C_out, C_in, K), jnp.float32, -bound, bound)
    bias = jax.random.uniform(k2, (C_out,), jnp.float32, -bound, bound)
    gamma = jnp.ones((C_out,), jnp.float32)   # BatchNorm1d default weight
    beta = jnp.zeros((C_out,), jnp.float32)   # BatchNorm1d default bias
    x = jax.random.normal(k3, (B, C_in, T), jnp.float32)

    # Dropout disabled -> check against a pure-JAX reference of conv+ReLU+BN.
    y0 = conv1d_block(x, weight, bias, gamma, beta, dropout_p=0.0, key=k4, eps=eps)
    y0 = jax.block_until_ready(y0)

    ref = jax.lax.conv_general_dilated(
        x, weight, window_strides=(1,), padding=[(K // 2, K // 2)],
        dimension_numbers=("NCW", "OIW", "NCW"))
    ref = jnp.maximum(ref + bias[None, :, None], 0.0)
    mu = jnp.mean(ref, axis=(0, 2), keepdims=True)
    va = jnp.mean((ref - mu) ** 2, axis=(0, 2), keepdims=True)
    ref = (ref - mu) / jnp.sqrt(va + eps) * gamma[None, :, None] + beta[None, :, None]

    assert y0.shape == (B, C_out, T), y0.shape
    err = float(jnp.max(jnp.abs(y0 - ref)))
    assert err < 5e-3, f"max abs err {err}"

    # Dropout enabled (inverted dropout; mask from jax.random, not torch's RNG).
    y1 = conv1d_block(x, weight, bias, gamma, beta, dropout_p=dropout, key=k4, eps=eps)
    y1 = jax.block_until_ready(y1)
    assert y1.shape == (B, C_out, T), y1.shape
    assert bool(jnp.all(jnp.isfinite(y1)))

    print("KERNEL_OK")
</pallas_src>

<mosaic_0001>
module attributes {stable_mosaic.version = 11 : i64} {
  func.func @_conv1d_block_kernel(%arg0: memref<2x8x128xf32, #tpu.memory_space<vmem>>, %arg1: memref<16x40xf32, #tpu.memory_space<vmem>>, %arg2: memref<16x1xf32, #tpu.memory_space<vmem>>, %arg3: memref<16x1xf32, #tpu.memory_space<vmem>>, %arg4: memref<16x1xf32, #tpu.memory_space<vmem>>, %arg5: memref<2x16x128xi32, #tpu.memory_space<vmem>>, %arg6: memref<2x16x128xf32, #tpu.memory_space<vmem>>) attributes {dimension_semantics = [], scalar_prefetch = 0 : i64, scratch_operands = 0 : i64, tpu.core_type = #tpu.core_type<tc>} {
    %cst = arith.constant 0.000000e+00 : f32
    %0 = vector.broadcast %cst : f32 to vector<8x2xf32>
    %cst_0 = arith.constant 0.000000e+00 : f32
    %1 = vector.broadcast %cst_0 : f32 to vector<16x1xf32>
    %cst_1 = arith.constant 0.000000e+00 : f32
    %2 = vector.broadcast %cst_1 : f32 to vector<16x1xf32>
    %c0 = arith.constant 0 : index
    %c0_2 = arith.constant 0 : index
    %c0_3 = arith.constant 0 : index
    %3 = vector.load %arg0[%c0, %c0_2, %c0_3] : memref<2x8x128xf32, #tpu.memory_space<vmem>>, vector<1x8x128xf32>
    %4 = vector.shape_cast %3 : vector<1x8x128xf32> to vector<8x128xf32>
    %5 = tpu.concatenate %0, %4, %0 in 1 : vector<8x2xf32>, vector<8x128xf32>, vector<8x2xf32> -> vector<8x132xf32>
    %6 = vector.extract_strided_slice %5 {offsets = [0, 0], sizes = [8, 128], strides = [1, 1]} : vector<8x132xf32> to vector<8x128xf32>
    %7 = vector.extract_strided_slice %5 {offsets = [0, 1], sizes = [8, 128], strides = [1, 1]} : vector<8x132xf32> to vector<8x128xf32>
    %8 = vector.extract_strided_slice %5 {offsets = [0, 2], sizes = [8, 128], strides = [1, 1]} : vector<8x132xf32> to vector<8x128xf32>
    %9 = vector.extract_strided_slice %5 {offsets = [0, 3], sizes = [8, 128], strides = [1, 1]} : vector<8x132xf32> to vector<8x128xf32>
    %10 = vector.extract_strided_slice %5 {offsets = [0, 4], sizes = [8, 128], strides = [1, 1]} : vector<8x132xf32> to vector<8x128xf32>
    %11 = tpu.concatenate %6, %7, %8, %9, %10 in 0 : vector<8x128xf32>, vector<8x128xf32>, vector<8x128xf32>, vector<8x128xf32>, vector<8x128xf32> -> vector<40x128xf32>
    %c0_4 = arith.constant 0 : index
    %c0_5 = arith.constant 0 : index
    %12 = vector.load %arg1[%c0_4, %c0_5] : memref<16x40xf32, #tpu.memory_space<vmem>>, vector<16x40xf32>
    %cst_6 = arith.constant dense<0.000000e+00> : vector<16x128xf32>
    %13 = tpu.matmul %12, %11, %cst_6 {dimension_numbers = #tpu.dot_dimension_numbers<[1], [0], [0], [1], [0, 0, 1, 1], [], []>} : vector<16x40xf32>, vector<40x128xf32>, vector<16x128xf32> -> vector<16x128xf32>
    %c0_7 = arith.constant 0 : index
    %c0_8 = arith.constant 0 : index
    %14 = vector.load %arg2[%c0_7, %c0_8] : memref<16x1xf32, #tpu.memory_space<vmem>>, vector<16x1xf32>
    %15 = vector.broadcast %14 : vector<16x1xf32> to vector<16x128xf32>
    %16 = arith.addf %13, %15 : vector<16x128xf32>
    %cst_9 = arith.constant 0.000000e+00 : f32
    %17 = vector.broadcast %cst_9 : f32 to vector<16x128xf32>
    %18 = arith.maximumf %16, %17 : vector<16x128xf32>
    %c0_10 = arith.constant 0 : index
    %c0_11 = arith.constant 0 : index
    %c0_12 = arith.constant 0 : index
    %19 = vector.load %arg6[%c0_10, %c0_11, %c0_12] : memref<2x16x128xf32, #tpu.memory_space<vmem>>, vector<1x16x128xf32>
    %20 = vector.shape_cast %19 : vector<1x16x128xf32> to vector<16x128xf32>
    %21 = vector.shape_cast %18 : vector<16x128xf32> to vector<1x16x128xf32>
    tpu.vector_store %arg6[%c0_10, %c0_11, %c0_12], %21 {strides = array<i32>} : memref<2x16x128xf32, #tpu.memory_space<vmem>>, vector<1x16x128xf32>,
    %cst_13 = arith.constant dense<0.000000e+00> : vector<16xf32>
    %22 = vector.multi_reduction <add>, %18, %cst_13 [1] : vector<16x128xf32> to vector<16xf32>
    %23 = vector.shape_cast %22 : vector<16xf32> to vector<16x1xf32>
    %24 = arith.addf %1, %23 : vector<16x1xf32>
    %25 = arith.mulf %18, %18 : vector<16x128xf32>
    %cst_14 = arith.constant dense<0.000000e+00> : vector<16xf32>
    %26 = vector.multi_reduction <add>, %25, %cst_14 [1] : vector<16x128xf32> to vector<16xf32>
    %27 = vector.shape_cast %26 : vector<16xf32> to vector<16x1xf32>
    %28 = arith.addf %2, %27 : vector<16x1xf32>
    %c1 = arith.constant 1 : index
    %c0_15 = arith.constant 0 : index
    %c0_16 = arith.constant 0 : index
    %29 = vector.load %arg0[%c1, %c0_15, %c0_16] : memref<2x8x128xf32, #tpu.memory_space<vmem>>, vector<1x8x128xf32>
    %30 = vector.shape_cast %29 : vector<1x8x128xf32> to vector<8x128xf32>
    %31 = tpu.concatenate %0, %30, %0 in 1 : vector<8x2xf32>, vector<8x128xf32>, vector<8x2xf32> -> vector<8x132xf32>
    %32 = vector.extract_strided_slice %31 {offsets = [0, 0], sizes = [8, 128], strides = [1, 1]} : vector<8x132xf32> to vector<8x128xf32>
    %33 = vector.extract_strided_slice %31 {offsets = [0, 1], sizes = [8, 128], strides = [1, 1]} : vector<8x132xf32> to vector<8x128xf32>
    %34 = vector.extract_strided_slice %31 {offsets = [0, 2], sizes = [8, 128], strides = [1, 1]} : vector<8x132xf32> to vector<8x128xf32>
    %35 = vector.extract_strided_slice %31 {offsets = [0, 3], sizes = [8, 128], strides = [1, 1]} : vector<8x132xf32> to vector<8x128xf32>
    %36 = vector.extract_strided_slice %31 {offsets = [0, 4], sizes = [8, 128], strides = [1, 1]} : vector<8x132xf32> to vector<8x128xf32>
    %37 = tpu.concatenate %32, %33, %34, %35, %36 in 0 : vector<8x128xf32>, vector<8x128xf32>, vector<8x128xf32>, vector<8x128xf32>, vector<8x128xf32> -> vector<40x128xf32>
    %c0_17 = arith.constant 0 : index
    %c0_18 = arith.constant 0 : index
    %38 = vector.load %arg1[%c0_17, %c0_18] : memref<16x40xf32, #tpu.memory_space<vmem>>, vector<16x40xf32>
    %cst_19 = arith.constant dense<0.000000e+00> : vector<16x128xf32>
    %39 = tpu.matmul %38, %37, %cst_19 {dimension_numbers = #tpu.dot_dimension_numbers<[1], [0], [0], [1], [0, 0, 1, 1], [], []>} : vector<16x40xf32>, vector<40x128xf32>, vector<16x128xf32> -> vector<16x128xf32>
    %c0_20 = arith.constant 0 : index
    %c0_21 = arith.constant 0 : index
    %40 = vector.load %arg2[%c0_20, %c0_21] : memref<16x1xf32, #tpu.memory_space<vmem>>, vector<16x1xf32>
    %41 = vector.broadcast %40 : vector<16x1xf32> to vector<16x128xf32>
    %42 = arith.addf %39, %41 : vector<16x128xf32>
    %cst_22 = arith.constant 0.000000e+00 : f32
    %43 = vector.broadcast %cst_22 : f32 to vector<16x128xf32>
    %44 = arith.maximumf %42, %43 : vector<16x128xf32>
    %c1_23 = arith.constant 1 : index
    %c0_24 = arith.constant 0 : index
    %c0_25 = arith.constant 0 : index
    %45 = vector.load %arg6[%c1_23, %c0_24, %c0_25] : memref<2x16x128xf32, #tpu.memory_space<vmem>>, vector<1x16x128xf32>
    %46 = vector.shape_cast %45 : vector<1x16x128xf32> to vector<16x128xf32>
    %47 = vector.shape_cast %44 : vector<16x128xf32> to vector<1x16x128xf32>
    tpu.vector_store %arg6[%c1_23, %c0_24, %c0_25], %47 {strides = array<i32>} : memref<2x16x128xf32, #tpu.memory_space<vmem>>, vector<1x16x128xf32>,
    %cst_26 = arith.constant dense<0.000000e+00> : vector<16xf32>
    %48 = vector.multi_reduction <add>, %44, %cst_26 [1] : vector<16x128xf32> to vector<16xf32>
    %49 = vector.shape_cast %48 : vector<16xf32> to vector<16x1xf32>
    %50 = arith.addf %24, %49 : vector<16x1xf32>
    %51 = arith.mulf %44, %44 : vector<16x128xf32>
    %cst_27 = arith.constant dense<0.000000e+00> : vector<16xf32>
    %52 = vector.multi_reduction <add>, %51, %cst_27 [1] : vector<16x128xf32> to vector<16xf32>
    %53 = vector.shape_cast %52 : vector<16xf32> to vector<16x1xf32>
    %54 = arith.addf %28, %53 : vector<16x1xf32>
    %cst_28 = arith.constant 3.906250e-03 : f32
    %55 = vector.broadcast %cst_28 : f32 to vector<16x1xf32>
    %56 = arith.mulf %50, %55 : vector<16x1xf32>
    %cst_29 = arith.constant 3.906250e-03 : f32
    %57 = vector.broadcast %cst_29 : f32 to vector<16x1xf32>
    %58 = arith.mulf %54, %57 : vector<16x1xf32>
    %59 = arith.mulf %56, %56 : vector<16x1xf32>
    %60 = arith.subf %58, %59 : vector<16x1xf32>
    %cst_30 = arith.constant 9.99999974E-6 : f32
    %61 = vector.broadcast %cst_30 : f32 to vector<16x1xf32>
    %62 = arith.addf %60, %61 : vector<16x1xf32>
    %63 = math.rsqrt %62 : vector<16x1xf32>
    %c0_31 = arith.constant 0 : index
    %c0_32 = arith.constant 0 : index
    %64 = vector.load %arg3[%c0_31, %c0_32] : memref<16x1xf32, #tpu.memory_space<vmem>>, vector<16x1xf32>
    %65 = arith.mulf %64, %63 : vector<16x1xf32>
    %cst_33 = arith.constant 1.000000e+00 : f32
    %66 = vector.broadcast %cst_33 : f32 to vector<16x1xf32>
    %67 = arith.mulf %65, %66 : vector<16x1xf32>
    %c0_34 = arith.constant 0 : index
    %c0_35 = arith.constant 0 : index
    %68 = vector.load %arg4[%c0_34, %c0_35] : memref<16x1xf32, #tpu.memory_space<vmem>>, vector<16x1xf32>
    %c0_36 = arith.constant 0 : index
    %c0_37 = arith.constant 0 : index
    %69 = vector.load %arg3[%c0_36, %c0_37] : memref<16x1xf32, #tpu.memory_space<vmem>>, vector<16x1xf32>
    %70 = arith.mulf %56, %69 : vector<16x1xf32>
    %71 = arith.mulf %70, %63 : vector<16x1xf32>
    %72 = arith.subf %68, %71 : vector<16x1xf32>
    %cst_38 = arith.constant 1.000000e+00 : f32
    %73 = vector.broadcast %cst_38 : f32 to vector<16x1xf32>
    %74 = arith.mulf %72, %73 : vector<16x1xf32>
    %c0_39 = arith.constant 0 : index
    %c0_40 = arith.constant 0 : index
    %c0_41 = arith.constant 0 : index
    %75 = vector.load %arg6[%c0_39, %c0_40, %c0_41] : memref<2x16x128xf32, #tpu.memory_space<vmem>>, vector<1x16x128xf32>
    %76 = vector.shape_cast %75 : vector<1x16x128xf32> to vector<16x128xf32>
    %77 = vector.broadcast %67 : vector<16x1xf32> to vector<16x128xf32>
    %78 = arith.mulf %76, %77 : vector<16x128xf32>
    %79 = vector.broadcast %74 : vector<16x1xf32> to vector<16x128xf32>
    %80 = arith.addf %78, %79 : vector<16x128xf32>
    %c0_42 = arith.constant 0 : index
    %c0_43 = arith.constant 0 : index
    %c0_44 = arith.constant 0 : index
    %81 = vector.load %arg6[%c0_42, %c0_43, %c0_44] : memref<2x16x128xf32, #tpu.memory_space<vmem>>, vector<1x16x128xf32>
    %82 = vector.shape_cast %81 : vector<1x16x128xf32> to vector<16x128xf32>
    %83 = vector.shape_cast %80 : vector<16x128xf32> to vector<1x16x128xf32>
    tpu.vector_store %arg6[%c0_42, %c0_43, %c0_44], %83 {strides = array<i32>} : memref<2x16x128xf32, #tpu.memory_space<vmem>>, vector<1x16x128xf32>,
    %c1_45 = arith.constant 1 : index
    %c0_46 = arith.constant 0 : index
    %c0_47 = arith.constant 0 : index
    %84 = vector.load %arg6[%c1_45, %c0_46, %c0_47] : memref<2x16x128xf32, #tpu.memory_space<vmem>>, vector<1x16x128xf32>
    %85 = vector.shape_cast %84 : vector<1x16x128xf32> to vector<16x128xf32>
    %86 = vector.broadcast %67 : vector<16x1xf32> to vector<16x128xf32>
    %87 = arith.mulf %85, %86 : vector<16x128xf32>
    %88 = vector.broadcast %74 : vector<16x1xf32> to vector<16x128xf32>
    %89 = arith.addf %87, %88 : vector<16x128xf32>
    %c1_48 = arith.constant 1 : index
    %c0_49 = arith.constant 0 : index
    %c0_50 = arith.constant 0 : index
    %90 = vector.load %arg6[%c1_48, %c0_49, %c0_50] : memref<2x16x128xf32, #tpu.memory_space<vmem>>, vector<1x16x128xf32>
    %91 = vector.shape_cast %90 : vector<1x16x128xf32> to vector<16x128xf32>
    %92 = vector.shape_cast %89 : vector<16x128xf32> to vector<1x16x128xf32>
    tpu.vector_store %arg6[%c1_48, %c0_49, %c0_50], %92 {strides = array<i32>} : memref<2x16x128xf32, #tpu.memory_space<vmem>>, vector<1x16x128xf32>,
    return
  }
}

</mosaic_0001>

<llo_original>
// kernel: tpu_custom_call.1
$region0: #{tpu_custom_call.1}
  #allocation0 [shape = 'u32[]', space=smem, size = 0x4, offset = 0x4, fixed_abs, tag = 'smem constant byte address 0x4 - core index']
  #allocation1 [shape = 'u32[144,128]{1,0:T(1,128)}', space=vmem, size = 0x12000, scoped, tag = 'internal scratch']
  %s0 = inlined_call_operand.vmem [shape: f32[2,8,128], index: 0, kind: input, shape index: {}]
  %s1 = inlined_call_operand.hbm [shape: f32[16,40], index: 1, kind: input, shape index: {}]
  %s2 = inlined_call_operand.vmem [shape: f32[16,1], index: 2, kind: input, shape index: {}]
  %s3 = inlined_call_operand.vmem [shape: f32[16,1], index: 3, kind: input, shape index: {}]
  %s4 = inlined_call_operand.vmem [shape: f32[16,1], index: 4, kind: input, shape index: {}]
  %s5 = inlined_call_operand.vmem [shape: s32[2,16,128], index: 5, kind: input, shape index: {}]
  %s6 = inlined_call_operand.hbm [shape: f32[2,16,128], index: 6, kind: output, shape index: {}]
  %s7 = sld [smem:[#allocation0]]
  $region38: #{tpu_custom_call.1} parent=0
    _
  %s9 = ssub.s32 1, %s7
  %s10 = scalar_select 0, %s9, %s7
  $region1: #{tpu_custom_call.1} parent=0
    #allocation2 [shape = 'u8[8192]{0}', space=vmem, size = 0x2000, scoped, tag = 'input window, operand 1, single buffered']
    #allocation3 [shape = 's32[1]{0}', space=sflag, size = 0x4, scoped, tag = 'scoped memory for tpu_custom_call.1']
    #allocation4 [shape = 's32[1]{0}', space=sflag, size = 0x4, scoped, tag = 'scoped memory for tpu_custom_call.1']
    #allocation5 [shape = 'u8[16384]{0}', space=vmem, size = 0x4000, scoped, tag = 'output window, operand 0, single buffered']
    %11 = vsyncpa [#allocation3], 0
    %12 = vsyncpa [#allocation4], 0
    // Predicated region
    $region2: #{tpu_custom_call.1} parent=1 // pred_check
      _
    $region3: #{tpu_custom_call.1} parent=1 // pred_check_branch
      %14 = sbr.rel (0) target = $region5
    $region4: #{tpu_custom_call.1} parent=1 // pred_region
      _
    $region5: #{tpu_custom_call.1} parent=1 // pred_fallthru
      _
    // Predicated region
    $region6: #{tpu_custom_call.1} parent=1 // pred_check
      _
    $region7: #{tpu_custom_call.1} parent=1 // pred_check_branch
      %16 = sbr.rel (0) target = $region9
    $region8: #{tpu_custom_call.1} parent=1 // pred_region
      %s18 = ssub.s32 256, 256
      %19 = vsyncadd [#allocation3], %s18
      %s20 = sshll.u32 [#allocation2], 4
      %s21 = int_to_ptr.vmem [resolvable:$true] %s20
      %26 = dma.hbm_to_vmem [thread:$0]  %s1, 256, %s21, [#allocation3], 128, 128, 8
    $region9: #{tpu_custom_call.1} parent=1 // pred_fallthru
      _
    // Predicated region
    $region10: #{tpu_custom_call.1} parent=1 // pred_check
      _
    $region11: #{tpu_custom_call.1} parent=1 // pred_check_branch
      %28 = sbr.rel (0) target = $region13
    $region12: #{tpu_custom_call.1} parent=1 // pred_region
      _
    $region13: #{tpu_custom_call.1} parent=1 // pred_fallthru
      _
    // Predicated region
    $region14: #{tpu_custom_call.1} parent=1 // pred_check
      _
    $region15: #{tpu_custom_call.1} parent=1 // pred_check_branch
      %30 = sbr.rel (0) target = $region17
    $region16: #{tpu_custom_call.1} parent=1 // pred_region
      _
    $region17: #{tpu_custom_call.1} parent=1 // pred_fallthru
      _
    // Predicated region
    $region18: #{tpu_custom_call.1} parent=1 // pred_check
      _
    $region19: #{tpu_custom_call.1} parent=1 // pred_check_branch
      %32 = sbr.rel (0) target = $region21
    $region20: #{tpu_custom_call.1} parent=1 // pred_region
      _
    $region21: #{tpu_custom_call.1} parent=1 // pred_fallthru
      _
    // Predicated region
    $region22: #{tpu_custom_call.1} parent=1 // pred_check
      _
    $region23: #{tpu_custom_call.1} parent=1 // pred_check_branch
      %34 = sbr.rel (0) target = $region25
    $region24: #{tpu_custom_call.1} parent=1 // pred_region
      _
    $region25: #{tpu_custom_call.1} parent=1 // pred_fallthru
      _
    // Predicated region
    $region26: #{tpu_custom_call.1} parent=1 // pred_check
      _
    $region27: #{tpu_custom_call.1} parent=1 // pred_check_branch
      %36 = sbr.rel (0) target = $region29
    $region28: #{tpu_custom_call.1} parent=1 // pred_region
      %37 = dma.done [#allocation3], 256
    $region29: #{tpu_custom_call.1} parent=1 // pred_fallthru
      _
    %v38 = vld [vmem:[%s0] sm:$0xff]
    %40 = vrot.lane.b32.xlu0 %v38, 2
    %v41 = vpop.permute.xlu0 %40
    %vm43 = vcmask 15360
    %v44 = vsel %vm43, 0.0, %v41
    %v45 = vsel %vm43, %v41, 0.0
    %48 = vrot.lane.b32.xlu0 %v44, 127
    %v49 = vpop.permute.xlu0 %48
    %50 = vrot.lane.b32.xlu0 %v45, 127
    %v51 = vpop.permute.xlu0 %50
    %vm52 = vcmask 1039360
    %v53 = vsel %vm52, %v49, %v51
    %55 = vrot.lane.b32.xlu0 %v44, 126
    %v56 = vpop.permute.xlu0 %55
    %57 = vrot.lane.b32.xlu0 %v45, 126
    %v58 = vpop.permute.xlu0 %57
    %vm59 = vcmask 1031168
    %v60 = vsel %vm59, %v56, %v58
    %62 = vrot.lane.b32.xlu0 %v44, 125
    %v63 = vpop.permute.xlu0 %62
    %64 = vrot.lane.b32.xlu0 %v45, 125
    %v65 = vpop.permute.xlu0 %64
    %vm66 = vcmask 1022976
    %v67 = vsel %vm66, %v63, %v65
    %69 = vrot.lane.b32.xlu0 %v44, 124
    %v70 = vpop.permute.xlu0 %69
    %71 = vrot.lane.b32.xlu0 %v45, 124
    %v72 = vpop.permute.xlu0 %71
    %vm73 = vcmask 1014784
    %v74 = vsel %vm73, %v70, %v72
    %v76 = vld [vmem:[#allocation2] sm:$0xff]
    %v77 = vld [vmem:[#allocation2 + $0x8] sm:$0xff]
    %v78 = vld [vmem:[%s2] sm:$0xff]
    %v79 = vld [vmem:[%s2 + $0x8] sm:$0xff]
    %81 = vset.pattern.permute.xlu0 0
    %82 = vperm.xlu0 %81, %v78
    %v83 = vpop.permute.xlu0 %82
    %86 = vset.pattern.permute.xlu0 0
    %87 = vperm.xlu0 %86, %v79
    %v88 = vpop.permute.xlu0 %87
    %vm90 = vcmask 326656
    %v92 = vsel %vm90, %v76, 0
    %v95 = vsel %vm90, %v77, 0
    %97 = vmatprep.subr.mxu0 0.0
    %98 = vmatpush1.msra.mxu0 0.0
    %99 = vmatprep.subr.mxu0 0.0
    %100 = vmatpush1.msra.mxu0 0.0
    %101 = vmatprep.subr.mxu0 0.0
    %102 = vmatpush1.msra.mxu0 0.0
    %103 = vmatprep.subr.mxu0 0.0
    %104 = vmatpush1.msra.mxu0 0.0
    %105 = vmatprep.subr.mxu0 0.0
    %106 = vmatpush1.msra.mxu0 0.0
    %107 = vmatprep.subr.mxu0 0.0
    %108 = vmatpush1.msra.mxu0 0.0
    %109 = vmatprep.subr.mxu0 0.0
    %110 = vmatpush1.msra.mxu0 0.0
    %111 = vmatprep.subr.mxu0 0.0
    %112 = vmatpush1.msra.mxu0 0.0
    %113 = vmatprep.subr.mxu0 0.0
    %114 = vmatpush1.msra.mxu0 0.0
    %115 = vmatprep.subr.mxu0 0.0
    %116 = vmatpush1.msra.mxu0 0.0
    %117 = vmatprep.subr.mxu0 0.0
    %118 = vmatpush1.msra.mxu0 0.0
    %119 = vmatprep.subr.mxu0 0.0
    %120 = vmatpush1.msra.mxu0 %v74
    %121 = vmatprep.subr.mxu0 0.0
    %122 = vmatpush1.msra.mxu0 %v67
    %123 = vmatprep.subr.mxu0 0.0
    %124 = vmatpush1.msra.mxu0 %v60
    %125 = vmatprep.subr.mxu0 0.0
    %126 = vmatpush1.msra.mxu0 %v53
    %127 = vmatprep.subr.mxu0 0.0
    %128 = vmatpush1.msra.mxu0 %v44
    %129 = vmatprep.subr.mxu0 0.0
    %130 = vmatpush2.msra.mxu0 0.0
    %131 = vmatprep.subr.mxu0 0.0
    %132 = vmatpush2.msra.mxu0 0.0
    %133 = vmatprep.subr.mxu0 0.0
    %134 = vmatpush2.msra.mxu0 0.0
    %135 = vmatprep.subr.mxu0 0.0
    %136 = vmatpush2.msra.mxu0 0.0
    %137 = vmatprep.subr.mxu0 0.0
    %138 = vmatpush2.msra.mxu0 0.0
    %139 = vmatprep.subr.mxu0 0.0
    %140 = vmatpush2.msra.mxu0 0.0
    %141 = vmatprep.subr.mxu0 0.0
    %142 = vmatpush2.msra.mxu0 0.0
    %143 = vmatprep.subr.mxu0 0.0
    %144 = vmatpush2.msra.mxu0 0.0
    %145 = vmatprep.subr.mxu0 0.0
    %146 = vmatpush2.msra.mxu0 0.0
    %147 = vmatprep.subr.mxu0 0.0
    %148 = vmatpush2.msra.mxu0 0.0
    %149 = vmatprep.subr.mxu0 0.0
    %150 = vmatpush2.msra.mxu0 0.0
    %151 = vmatprep.subr.mxu0 0.0
    %152 = vmatpush2.msra.mxu0 0.0
    %153 = vmatprep.subr.mxu0 0.0
    %154 = vmatpush2.msra.mxu0 0.0
    %155 = vmatprep.subr.mxu0 0.0
    %156 = vmatpush2.msra.mxu0 0.0
    %157 = vmatprep.subr.mxu0 0.0
    %158 = vmatpush2.msra.mxu0 0.0
    %159 = vmatprep.subr.mxu0 0.0
    %160 = vmatpush2.msra.mxu0 0.0
    %161 = vmatprep.mubr.f32.mxu0 0.0
    %162 = vmatmul.mubr.f32.gmra.mxu0 %v92
    %v163 = vpop.f32.mrf.mxu0
    %v164 = vadd.f32 %v83, %v163
    %v165 = vpop.f32.mrf.mxu0
    %166 = vmatprep.mubr.f32.mxu0 0.0
    %167 = vmatmul.mubr.f32.gmra.mxu0 %v95
    %v168 = vpop.f32.mrf.mxu0
    %v169 = vadd.f32 %v88, %v168
    %v170 = vpop.f32.mrf.mxu0
    %171 = vdwg.mxu0
    %v172 = vmax.f32 %v164, 0.0
    %v173 = vmax.f32 %v169, 0.0
    %174 = vst [vmem:[#allocation5] sm:$0xff] %v172
    %175 = vst [vmem:[#allocation5 + $0x8] sm:$0xff] %v173
    %176 = vadd.xlane.f32.xlu0 %v172
    %v177 = vpop.xlane.xlu0 %176
    %178 = vadd.xlane.f32.xlu0 %v173
    %v179 = vpop.xlane.xlu0 %178
    %v180 = vadd.f32 %v177, 0.0
    %v181 = vadd.f32 %v179, 0.0
    %v182 = vmul.f32 %v172, %v172
    %v183 = vmul.f32 %v173, %v173
    %184 = vadd.xlane.f32.xlu0 %v182
    %v185 = vpop.xlane.xlu0 %184
    %186 = vadd.xlane.f32.xlu0 %v183
    %v187 = vpop.xlane.xlu0 %186
    %v188 = vadd.f32 %v185, 0.0
    %v189 = vadd.f32 %v187, 0.0
    %s190 = scalar_lea.vmem %s0, 8
    %v191 = vld [vmem:[%s190] sm:$0xff]
    %193 = vrot.lane.b32.xlu0 %v191, 2
    %v194 = vpop.permute.xlu0 %193
    %v196 = vsel %vm43, 0.0, %v194
    %v197 = vsel %vm43, %v194, 0.0
    %200 = vrot.lane.b32.xlu0 %v196, 127
    %v201 = vpop.permute.xlu0 %200
    %202 = vrot.lane.b32.xlu0 %v197, 127
    %v203 = vpop.permute.xlu0 %202
    %v204 = vsel %vm52, %v201, %v203
    %206 = vrot.lane.b32.xlu0 %v196, 126
    %v207 = vpop.permute.xlu0 %206
    %208 = vrot.lane.b32.xlu0 %v197, 126
    %v209 = vpop.permute.xlu0 %208
    %v210 = vsel %vm59, %v207, %v209
    %212 = vrot.lane.b32.xlu0 %v196, 125
    %v213 = vpop.permute.xlu0 %212
    %214 = vrot.lane.b32.xlu0 %v197, 125
    %v215 = vpop.permute.xlu0 %214
    %v216 = vsel %vm66, %v213, %v215
    %218 = vrot.lane.b32.xlu0 %v196, 124
    %v219 = vpop.permute.xlu0 %218
    %220 = vrot.lane.b32.xlu0 %v197, 124
    %v221 = vpop.permute.xlu0 %220
    %v222 = vsel %vm73, %v219, %v221
    %v224 = vld [vmem:[#allocation2] sm:$0xff]
    %v225 = vld [vmem:[#allocation2 + $0x8] sm:$0xff]
    %v226 = vld [vmem:[%s2] sm:$0xff]
    %v227 = vld [vmem:[%s2 + $0x8] sm:$0xff]
    %229 = vset.pattern.permute.xlu0 0
    %230 = vperm.xlu0 %229, %v226
    %v231 = vpop.permute.xlu0 %230
    %234 = vset.pattern.permute.xlu0 0
    %235 = vperm.xlu0 %234, %v227
    %v236 = vpop.permute.xlu0 %235
    %v239 = vsel %vm90, %v224, 0
    %v242 = vsel %vm90, %v225, 0
    %244 = vmatprep.subr.mxu0 0.0
    %245 = vmatpush1.msra.mxu0 0.0
    %246 = vmatprep.subr.mxu0 0.0
    %247 = vmatpush1.msra.mxu0 0.0
    %248 = vmatprep.subr.mxu0 0.0
    %249 = vmatpush1.msra.mxu0 0.0
    %250 = vmatprep.subr.mxu0 0.0
    %251 = vmatpush1.msra.mxu0 0.0
    %252 = vmatprep.subr.mxu0 0.0
    %253 = vmatpush1.msra.mxu0 0.0
    %254 = vmatprep.subr.mxu0 0.0
    %255 = vmatpush1.msra.mxu0 0.0
    %256 = vmatprep.subr.mxu0 0.0
    %257 = vmatpush1.msra.mxu0 0.0
    %258 = vmatprep.subr.mxu0 0.0
    %259 = vmatpush1.msra.mxu0 0.0
    %260 = vmatprep.subr.mxu0 0.0
    %261 = vmatpush1.msra.mxu0 0.0
    %262 = vmatprep.subr.mxu0 0.0
    %263 = vmatpush1.msra.mxu0 0.0
    %264 = vmatprep.subr.mxu0 0.0
    %265 = vmatpush1.msra.mxu0 0.0
    %266 = vmatprep.subr.mxu0 0.0
    %267 = vmatpush1.msra.mxu0 %v222
    %268 = vmatprep.subr.mxu0 0.0
    %269 = vmatpush1.msra.mxu0 %v216
    %270 = vmatprep.subr.mxu0 0.0
    %271 = vmatpush1.msra.mxu0 %v210
    %272 = vmatprep.subr.mxu0 0.0
    %273 = vmatpush1.msra.mxu0 %v204
    %274 = vmatprep.subr.mxu0 0.0
    %275 = vmatpush1.msra.mxu0 %v196
    %276 = vmatprep.subr.mxu0 0.0
    %277 = vmatpush2.msra.mxu0 0.0
    %278 = vmatprep.subr.mxu0 0.0
    %279 = vmatpush2.msra.mxu0 0.0
    %280 = vmatprep.subr.mxu0 0.0
    %281 = vmatpush2.msra.mxu0 0.0
    %282 = vmatprep.subr.mxu0 0.0
    %283 = vmatpush2.msra.mxu0 0.0
    %284 = vmatprep.subr.mxu0 0.0
    %285 = vmatpush2.msra.mxu0 0.0
    %286 = vmatprep.subr.mxu0 0.0
    %287 = vmatpush2.msra.mxu0 0.0
    %288 = vmatprep.subr.mxu0 0.0
    %289 = vmatpush2.msra.mxu0 0.0
    %290 = vmatprep.subr.mxu0 0.0
    %291 = vmatpush2.msra.mxu0 0.0
    %292 = vmatprep.subr.mxu0 0.0
    %293 = vmatpush2.msra.mxu0 0.0
    %294 = vmatprep.subr.mxu0 0.0
    %295 = vmatpush2.msra.mxu0 0.0
    %296 = vmatprep.subr.mxu0 0.0
    %297 = vmatpush2.msra.mxu0 0.0
    %298 = vmatprep.subr.mxu0 0.0
    %299 = vmatpush2.msra.mxu0 0.0
    %300 = vmatprep.subr.mxu0 0.0
    %301 = vmatpush2.msra.mxu0 0.0
    %302 = vmatprep.subr.mxu0 0.0
    %303 = vmatpush2.msra.mxu0 0.0
    %304 = vmatprep.subr.mxu0 0.0
    %305 = vmatpush2.msra.mxu0 0.0
    %306 = vmatprep.subr.mxu0 0.0
    %307 = vmatpush2.msra.mxu0 0.0
    %308 = vmatprep.mubr.f32.mxu0 0.0
    %309 = vmatmul.mubr.f32.gmra.mxu0 %v239
    %v310 = vpop.f32.mrf.mxu0
    %v311 = vadd.f32 %v231, %v310
    %v312 = vpop.f32.mrf.mxu0
    %313 = vmatprep.mubr.f32.mxu0 0.0
    %314 = vmatmul.mubr.f32.gmra.mxu0 %v242
    %v315 = vpop.f32.mrf.mxu0
    %v316 = vadd.f32 %v236, %v315
    %v317 = vpop.f32.mrf.mxu0
    %318 = vdwg.mxu0
    %v319 = vmax.f32 %v311, 0.0
    %v320 = vmax.f32 %v316, 0.0
    %s321 = scalar_lea.vmem [#allocation5], 16
    %322 = vst [vmem:[%s321] sm:$0xff] %v319
    %323 = vst [vmem:[%s321 + $0x8] sm:$0xff] %v320
    %324 = vadd.xlane.f32.xlu0 %v319
    %v325 = vpop.xlane.xlu0 %324
    %326 = vadd.xlane.f32.xlu0 %v320
    %v327 = vpop.xlane.xlu0 %326
    %v328 = vadd.f32 %v180, %v325
    %v329 = vadd.f32 %v181, %v327
    %v330 = vmul.f32 %v319, %v319
    %v331 = vmul.f32 %v320, %v320
    %332 = vadd.xlane.f32.xlu0 %v330
    %v333 = vpop.xlane.xlu0 %332
    %334 = vadd.xlane.f32.xlu0 %v331
    %v335 = vpop.xlane.xlu0 %334
    %v336 = vadd.f32 %v188, %v333
    %v337 = vadd.f32 %v189, %v335
    %v338 = vmul.f32 %v328, 0.00390625
    %v339 = vmul.f32 %v329, 0.00390625
    %v340 = vmul.f32 %v336, 0.00390625
    %v341 = vmul.f32 %v337, 0.00390625
    %v342 = vmul.f32 %v338, %v338
    %v343 = vmul.f32 %v339, %v339
    %v344 = vsub.f32 %v340, %v342
    %v345 = vsub.f32 %v341, %v343
    %v346 = vadd.f32 %v344, 1e-05
    %v347 = vadd.f32 %v345, 1e-05
    %v348 = vrsqrt.pop %v346
    %v349 = vrsqrt.pop %v347
    %v350 = vld [vmem:[%s3] sm:$0xff]
    %v351 = vld [vmem:[%s3 + $0x8] sm:$0xff]
    %v352 = vmul.f32 %v350, %v348
    %v353 = vmul.f32 %v351, %v349
    %v354 = vld [vmem:[%s4] sm:$0xff]
    %v355 = vld [vmem:[%s4 + $0x8] sm:$0xff]
    %v356 = vmul.f32 %v338, %v350
    %v357 = vmul.f32 %v339, %v351
    %v358 = vmul.f32 %v356, %v348
    %v359 = vmul.f32 %v357, %v349
    %v360 = vsub.f32 %v354, %v358
    %v361 = vsub.f32 %v355, %v359
    %v362 = vld [vmem:[#allocation5] sm:$0xff]
    %v363 = vld [vmem:[#allocation5 + $0x8] sm:$0xff]
    %365 = vset.pattern.permute.xlu0 0
    %366 = vperm.xlu0 %365, %v352
    %v367 = vpop.permute.xlu0 %366
    %370 = vset.pattern.permute.xlu0 0
    %371 = vperm.xlu0 %370, %v353
    %v372 = vpop.permute.xlu0 %371
    %v374 = vmul.f32 %v362, %v367
    %v375 = vmul.f32 %v363, %v372
    %377 = vset.pattern.permute.xlu0 0
    %378 = vperm.xlu0 %377, %v360
    %v379 = vpop.permute.xlu0 %378
    %382 = vset.pattern.permute.xlu0 0
    %383 = vperm.xlu0 %382, %v361
    %v384 = vpop.permute.xlu0 %383
    %v386 = vadd.f32 %v374, %v379
    %v387 = vadd.f32 %v375, %v384
    %388 = vst [vmem:[#allocation5] sm:$0xff] %v386
    %389 = vst [vmem:[#allocation5 + $0x8] sm:$0xff] %v387
    %v390 = vld [vmem:[%s321] sm:$0xff]
    %v391 = vld [vmem:[%s321 + $0x8] sm:$0xff]
    %v392 = vmul.f32 %v390, %v367
    %v393 = vmul.f32 %v391, %v372
    %v394 = vadd.f32 %v392, %v379
    %v395 = vadd.f32 %v393, %v384
    %396 = vst [vmem:[%s321] sm:$0xff] %v394
    %397 = vst [vmem:[%s321 + $0x8] sm:$0xff] %v395
    // Predicated region
    $region30: #{tpu_custom_call.1} parent=1 // pred_check
      _
    $region31: #{tpu_custom_call.1} parent=1 // pred_check_branch
      %399 = sbr.rel (0) target = $region33
    $region32: #{tpu_custom_call.1} parent=1 // pred_region
      %s401 = ssub.s32 512, 512
      %402 = vsyncadd [#allocation4], %s401
      %s403 = sshll.u32 [#allocation5], 4
      %s404 = int_to_ptr.vmem [resolvable:$true] %s403
      %409 = dma.vmem_to_hbm [thread:$0]  %s404, 512, %s6, [#allocation4], 128, 128, 8
    $region33: #{tpu_custom_call.1} parent=1 // pred_fallthru
      _
    // Predicated region
    $region34: #{tpu_custom_call.1} parent=1 // pred_check
      _
    $region35: #{tpu_custom_call.1} parent=1 // pred_check_branch
      %411 = sbr.rel (0) target = $region37
    $region36: #{tpu_custom_call.1} parent=1 // pred_region
      %412 = dma.done [#allocation4], 512
    $region37: #{tpu_custom_call.1} parent=1 // pred_fallthru
      _
    %413 = vsyncpa [#allocation3], 1
    %414 = vsyncpa [#allocation4], 1

</llo_original>
